<compile_context>
chip_gen: v7x
topology: tpu7x:2x2x1
jax: 0.10.0
libtpu: 0.0.40
codegen_flags: <defaults>
</compile_context>

<pallas_src>
import jax
import jax.numpy as jnp
from jax import lax
from jax.experimental import pallas as pl
from jax.experimental.pallas import tpu as pltpu


# ----------------------------------------------------------------------------
# Stage 1: batch-invariant graph normalization (runs once, outside the grid).
# ----------------------------------------------------------------------------
def process_graph_kernel(a_ref, ahat_ref, rs_ref):
    """A_hat = D^{-1}(A + I) with inf -> 0, and rowsum(A_hat)."""
    a = a_ref[...]                                      # [N, N] float32
    n = a.shape[0]
    row = lax.broadcasted_iota(jnp.int32, (n, n), 0)
    col = lax.broadcasted_iota(jnp.int32, (n, n), 1)
    a = a + jnp.where(row == col, 1.0, 0.0).astype(a.dtype)   # A + I
    deg = jnp.sum(a, axis=1, keepdims=True)             # [N, 1]
    inv_deg = jnp.where(deg == 0.0, 0.0, 1.0 / deg)     # degree^-1, inf -> 0
    a_hat = a * inv_deg                                 # == diag(inv_deg) @ (A+I)
    ahat_ref[...] = a_hat
    rs_ref[...] = jnp.sum(a_hat, axis=1, keepdims=True)  # [N, 1] (== 1 if deg>0)


# ----------------------------------------------------------------------------
# Stage 2: batched 2-layer GCN (grid over batch tiles).
# ----------------------------------------------------------------------------
def gcn_kernel(ahat_ref, rs_ref, x_ref, w1_ref, b1_ref, w2_ref, b2_ref, o_ref):
    a_hat = ahat_ref[...]                               # [N, N]
    x = x_ref[...]                                      # [BT, N, in_c]
    bt = x.shape[0]
    a_b = jnp.broadcast_to(a_hat, (bt,) + a_hat.shape)  # [BT, N, N] (hoisted once)

    # ---- layer 1 (reordered, in_c < hid_c): relu((A_hat @ X) @ W1 + rs*b1) --
    ax = jnp.einsum('bnm,bmf->bnf', a_b, x,
                    preferred_element_type=jnp.float32)          # [BT, N, in_c]
    h1 = jnp.einsum('bnf,fh->bnh', ax, w1_ref[...],
                    preferred_element_type=jnp.float32)          # [BT, N, hid_c]
    h1 = jnp.maximum(h1 + rs_ref[...] * b1_ref[...], 0.0)

    # ---- layer 2: relu(A_hat @ (H1 @ W2 + b2)) ------------------------------
    h2 = jnp.einsum('bnh,ho->bno', h1, w2_ref[...],
                    preferred_element_type=jnp.float32) + b2_ref[...]
    h2 = jnp.einsum('bnm,bmo->bno', a_b, h2,
                    preferred_element_type=jnp.float32)          # [BT, N, out_c]
    o_ref[...] = jnp.maximum(h2, 0.0).astype(o_ref.dtype)


def gcn_forward(graph, flow_x, w1, b1, w2, b2, *, batch_tile=None):
    """graph: [1, N, N]; flow_x: [B, N, T, C]; returns [B, N, 1, out_c]."""
    adj = graph[0]                                      # matches data['graph'][0]
    B, N = flow_x.shape[0], flow_x.shape[1]
    x = flow_x.reshape(B, N, -1)                        # [B, N, in_c]
    in_c = x.shape[-1]
    hid_c = w1.shape[1]
    out_c = w2.shape[1]

    # --- normalize the adjacency ONCE (hoisted out of the batch grid) -------
    a_hat, rs = pl.pallas_call(
        process_graph_kernel,
        out_shape=(jax.ShapeDtypeStruct((N, N), jnp.float32),
                   jax.ShapeDtypeStruct((N, 1), jnp.float32)),
    )(adj)

    # --- batched GCN, tiled over the batch dimension -------------------------
    if batch_tile is None:
        batch_tile = B                                  # whole batch per step
    assert B % batch_tile == 0, "batch must be divisible by batch_tile"
    bt = batch_tile
    grid = (B // bt,)

    out = pl.pallas_call(
        gcn_kernel,
        out_shape=jax.ShapeDtypeStruct((B, N, out_c), jnp.float32),
        grid_spec=pltpu.PrefetchScalarGridSpec(
            num_scalar_prefetch=0,
            grid=grid,
            in_specs=[
                pl.BlockSpec((N, N), lambda b: (0, 0)),            # A_hat
                pl.BlockSpec((N, 1), lambda b: (0, 0)),            # rowsum(A_hat)
                pl.BlockSpec((bt, N, in_c), lambda b: (b, 0, 0)),  # flow_x tile
                pl.BlockSpec((in_c, hid_c), lambda b: (0, 0)),     # W1 (in, out)
                pl.BlockSpec((1, hid_c), lambda b: (0, 0)),        # b1
                pl.BlockSpec((hid_c, out_c), lambda b: (0, 0)),    # W2 (in, out)
                pl.BlockSpec((1, out_c), lambda b: (0, 0)),        # b2
            ],
            out_specs=pl.BlockSpec((bt, N, out_c), lambda b: (b, 0, 0)),
        ),
        compiler_params=pltpu.CompilerParams(
            dimension_semantics=("parallel",)),
    )(a_hat, rs, x, w1, b1, w2, b2)

    return out[:, :, None, :]                           # unsqueeze(2)


def gcn_reference(graph, flow_x, w1, b1, w2, b2):
    adj = graph[0]
    N = adj.shape[0]
    a = adj + jnp.eye(N, dtype=adj.dtype)
    deg = jnp.sum(a, axis=1)
    inv = jnp.where(deg == 0.0, 0.0, 1.0 / deg)
    a_hat = jnp.diag(inv) @ a
    B = flow_x.shape[0]
    x = flow_x.reshape(B, flow_x.shape[1], -1)
    h1 = jax.nn.relu(jnp.einsum("nm,bmh->bnh", a_hat, x @ w1 + b1))
    h2 = jax.nn.relu(jnp.einsum("nm,bmh->bnh", a_hat, h1 @ w2 + b2))
    return h2[:, :, None, :]


if __name__ == "__main__":
    key = jax.random.PRNGKey(0)
    kg, kx, kw1, kb1, kw2, kb2 = jax.random.split(key, 6)

    B, N, T, C = 2, 16, 4, 2          # flow_x: [B, N, T, C] -> in_c = T*C = 8
    in_c, hid_c, out_c = T * C, 32, 16

    # Random 0/1 adjacency (with leading batch dim of 1, as indexed by [0]).
    graph = (jax.random.uniform(kg, (1, N, N)) > 0.7).astype(jnp.float32)
    flow_x = jax.random.normal(kx, (B, N, T, C), dtype=jnp.float32)

    # Deterministic parameter init (PyTorch Linear stores [out, in]; we keep
    # [in, out] so the kernel does x @ W directly — same math as x @ W^T).
    w1 = (jax.random.uniform(kw1, (in_c, hid_c), minval=-1.0, maxval=1.0)
          / jnp.sqrt(in_c)).astype(jnp.float32)
    b1 = (jax.random.uniform(kb1, (1, hid_c), minval=-1.0, maxval=1.0)
          / jnp.sqrt(in_c)).astype(jnp.float32)
    w2 = (jax.random.uniform(kw2, (hid_c, out_c), minval=-1.0, maxval=1.0)
          / jnp.sqrt(hid_c)).astype(jnp.float32)
    b2 = (jax.random.uniform(kb2, (1, out_c), minval=-1.0, maxval=1.0)
          / jnp.sqrt(hid_c)).astype(jnp.float32)

    out = gcn_forward(graph, flow_x, w1, b1, w2, b2)
    out = jax.block_until_ready(out)

    ref = gcn_reference(graph, flow_x, w1, b1, w2, b2)
    assert out.shape == (B, N, 1, out_c), out.shape
    assert jnp.allclose(out, ref, atol=1e-5, rtol=1e-5), "mismatch vs reference"

    print("KERNEL_OK")
</pallas_src>

<mosaic_0001>
module attributes {stable_mosaic.version = 11 : i64} {
  func.func @process_graph_kernel(%arg0: memref<16x16xf32, #tpu.memory_space<vmem>>, %arg1: memref<16x16xf32, #tpu.memory_space<vmem>>, %arg2: memref<16x1xf32, #tpu.memory_space<vmem>>) attributes {dimension_semantics = [], scalar_prefetch = 0 : i64, scratch_operands = 0 : i64, tpu.core_type = #tpu.core_type<tc>} {
    %c0 = arith.constant 0 : index
    %c0_0 = arith.constant 0 : index
    %0 = vector.load %arg0[%c0, %c0_0] : memref<16x16xf32, #tpu.memory_space<vmem>>, vector<16x16xf32>
    %1 = tpu.iota {dimensions = array<i32: 0>} : vector<16x16xi32>
    %2 = tpu.iota {dimensions = array<i32: 1>} : vector<16x16xi32>
    %3 = arith.cmpi eq, %1, %2 : vector<16x16xi32>
    %cst = arith.constant 1.000000e+00 : f32
    %cst_1 = arith.constant 0.000000e+00 : f32
    %4 = vector.broadcast %cst : f32 to vector<16x16xf32>
    %5 = vector.broadcast %cst_1 : f32 to vector<16x16xf32>
    %6 = arith.select %3, %4, %5 : vector<16x16xi1>, vector<16x16xf32>
    %7 = arith.addf %0, %6 : vector<16x16xf32>
    %cst_2 = arith.constant dense<0.000000e+00> : vector<16xf32>
    %8 = vector.multi_reduction <add>, %7, %cst_2 [1] : vector<16x16xf32> to vector<16xf32>
    %9 = vector.shape_cast %8 : vector<16xf32> to vector<16x1xf32>
    %cst_3 = arith.constant 0.000000e+00 : f32
    %10 = vector.broadcast %cst_3 : f32 to vector<16x1xf32>
    %11 = arith.cmpf oeq, %9, %10 : vector<16x1xf32>
    %cst_4 = arith.constant 1.000000e+00 : f32
    %12 = vector.broadcast %cst_4 : f32 to vector<16x1xf32>
    %13 = arith.divf %12, %9 : vector<16x1xf32>
    %cst_5 = arith.constant 0.000000e+00 : f32
    %14 = vector.broadcast %cst_5 : f32 to vector<16x1xf32>
    %15 = arith.select %11, %14, %13 : vector<16x1xi1>, vector<16x1xf32>
    %16 = vector.broadcast %15 : vector<16x1xf32> to vector<16x16xf32>
    %17 = arith.mulf %7, %16 : vector<16x16xf32>
    %c0_6 = arith.constant 0 : index
    %c0_7 = arith.constant 0 : index
    %18 = vector.load %arg1[%c0_6, %c0_7] : memref<16x16xf32, #tpu.memory_space<vmem>>, vector<16x16xf32>
    tpu.vector_store %arg1[%c0_6, %c0_7], %17 {strides = array<i32>} : memref<16x16xf32, #tpu.memory_space<vmem>>, vector<16x16xf32>,
    %cst_8 = arith.constant dense<0.000000e+00> : vector<16xf32>
    %19 = vector.multi_reduction <add>, %17, %cst_8 [1] : vector<16x16xf32> to vector<16xf32>
    %20 = vector.shape_cast %19 : vector<16xf32> to vector<16x1xf32>
    %c0_9 = arith.constant 0 : index
    %c0_10 = arith.constant 0 : index
    %21 = vector.load %arg2[%c0_9, %c0_10] : memref<16x1xf32, #tpu.memory_space<vmem>>, vector<16x1xf32>
    tpu.vector_store %arg2[%c0_9, %c0_10], %20 {strides = array<i32>} : memref<16x1xf32, #tpu.memory_space<vmem>>, vector<16x1xf32>,
    return
  }
}

</mosaic_0001>

<llo_original>
// kernel: tpu_custom_call.1
$region0: #{tpu_custom_call.1}
  #allocation0 [shape = 'u32[]', space=smem, size = 0x4, offset = 0x4, fixed_abs, tag = 'smem constant byte address 0x4 - core index']
  #allocation1 [shape = 'u32[144,128]{1,0:T(1,128)}', space=vmem, size = 0x12000, scoped, tag = 'internal scratch']
  %s0 = inlined_call_operand.hbm [shape: f32[16,16], index: 0, kind: input, shape index: {}]
  %s1 = inlined_call_operand.hbm [shape: f32[16,16], index: 1, kind: output, shape index: {0}]
  %s2 = inlined_call_operand.vmem [shape: f32[16,1], index: 2, kind: output, shape index: {1}]
  %3 = xla_tuple %s1, %s2
  %s4 = sld [smem:[#allocation0]]
  $region26: #{tpu_custom_call.1} parent=0
    _
  %s6 = ssub.s32 1, %s4
  %s7 = scalar_select 0, %s6, %s4
  $region1: #{tpu_custom_call.1} parent=0
    #allocation2 [shape = 'u8[8192]{0}', space=vmem, size = 0x2000, scoped, tag = 'input window, operand 0, single buffered']
    #allocation3 [shape = 's32[1]{0}', space=sflag, size = 0x4, scoped, tag = 'scoped memory for tpu_custom_call.1']
    #allocation4 [shape = 's32[1]{0}', space=sflag, size = 0x4, scoped, tag = 'scoped memory for tpu_custom_call.1']
    #allocation5 [shape = 'u8[8192]{0}', space=vmem, size = 0x2000, scoped, tag = 'output window, operand 0, single buffered']
    %8 = vsyncpa [#allocation3], 0
    %9 = vsyncpa [#allocation4], 0
    // Predicated region
    $region2: #{tpu_custom_call.1} parent=1 // pred_check
      _
    $region3: #{tpu_custom_call.1} parent=1 // pred_check_branch
      %11 = sbr.rel (0) target = $region5
    $region4: #{tpu_custom_call.1} parent=1 // pred_region
      %s13 = ssub.s32 256, 256
      %14 = vsyncadd [#allocation3], %s13
      %s15 = sshll.u32 [#allocation2], 4
      %s16 = int_to_ptr.vmem [resolvable:$true] %s15
      %21 = dma.hbm_to_vmem [thread:$0]  %s0, 256, %s16, [#allocation3], 128, 128, 8
    $region5: #{tpu_custom_call.1} parent=1 // pred_fallthru
      _
    // Predicated region
    $region6: #{tpu_custom_call.1} parent=1 // pred_check
      _
    $region7: #{tpu_custom_call.1} parent=1 // pred_check_branch
      %23 = sbr.rel (0) target = $region9
    $region8: #{tpu_custom_call.1} parent=1 // pred_region
      %24 = dma.done [#allocation3], 256
    $region9: #{tpu_custom_call.1} parent=1 // pred_fallthru
      _
    %v25 = vld [vmem:[#allocation2] sm:$0xff]
    %v26 = vld [vmem:[#allocation2 + $0x8] sm:$0xff]
    %v27 = vlaneseq
    %v28 = vshrl.u32 %v27, 7
    %v29 = vadd.s32 %v28, 8
    %v30 = vlaneseq
    %v31 = vand.u32 %v30, 127
    %vm32 = vcmp.eq.s32.totalorder %v28, %v31
    %vm33 = vcmp.eq.s32.totalorder %v29, %v31
    %v34 = vsel %vm32, 1.0, 0.0
    %v35 = vsel %vm33, 1.0, 0.0
    %v36 = vadd.f32 %v25, %v34
    %v37 = vadd.f32 %v26, %v35
    %vm38 = vcmask 130048
    %v39 = vsel %vm38, %v36, 0.0
    %40 = vadd.xlane.f32.xlu0 %v39
    %v41 = vpop.xlane.xlu0 %40
    %v42 = vsel %vm38, %v37, 0.0
    %43 = vadd.xlane.f32.xlu0 %v42
    %v44 = vpop.xlane.xlu0 %43
    %vm45 = vcmp.eq.f32.partialorder %v41, 0.0
    %vm46 = vcmp.eq.f32.partialorder %v44, 0.0
    %v47 = vrcp.pop %v41
    %v48 = vmul.f32 1.0, %v47
    %v49 = vrcp.pop %v44
    %v50 = vmul.f32 1.0, %v49
    %v51 = vsel %vm45, 0.0, %v48
    %v52 = vsel %vm46, 0.0, %v50
    %v53 = vmul.f32 %v36, %v51
    %v54 = vmul.f32 %v37, %v52
    %55 = vst.msk [vmem:[#allocation5] sm:$0xff] %vm38, %v53
    %56 = vst.msk [vmem:[#allocation5 + $0x8] sm:$0xff] %vm38, %v54
    %v57 = vsel %vm38, %v53, 0.0
    %58 = vadd.xlane.f32.xlu0 %v57
    %v59 = vpop.xlane.xlu0 %58
    %v60 = vsel %vm38, %v54, 0.0
    %61 = vadd.xlane.f32.xlu0 %v60
    %v62 = vpop.xlane.xlu0 %61
    %vm63 = vcmask 7168
    %64 = vst.msk [vmem:[%s2] sm:$0xff] %vm63, %v59
    %65 = vst.msk [vmem:[%s2 + $0x8] sm:$0xff] %vm63, %v62
    // Predicated region
    $region10: #{tpu_custom_call.1} parent=1 // pred_check
      _
    $region11: #{tpu_custom_call.1} parent=1 // pred_check_branch
      %67 = sbr.rel (0) target = $region13
    $region12: #{tpu_custom_call.1} parent=1 // pred_region
      %s69 = ssub.s32 256, 256
      %70 = vsyncadd [#allocation4], %s69
      %s71 = sshll.u32 [#allocation5], 4
      %s72 = int_to_ptr.vmem [resolvable:$true] %s71
      %77 = dma.vmem_to_hbm [thread:$0]  %s72, 256, %s1, [#allocation4], 128, 128, 8
    $region13: #{tpu_custom_call.1} parent=1 // pred_fallthru
      _
    // Predicated region
    $region14: #{tpu_custom_call.1} parent=1 // pred_check
      _
    $region15: #{tpu_custom_call.1} parent=1 // pred_check_branch
      %79 = sbr.rel (0) target = $region17
    $region16: #{tpu_custom_call.1} parent=1 // pred_region
      _
    $region17: #{tpu_custom_call.1} parent=1 // pred_fallthru
      _
    // Predicated region
    $region18: #{tpu_custom_call.1} parent=1 // pred_check
      _
    $region19: #{tpu_custom_call.1} parent=1 // pred_check_branch
      %81 = sbr.rel (0) target = $region21
    $region20: #{tpu_custom_call.1} parent=1 // pred_region
      %82 = dma.done [#allocation4], 256
    $region21: #{tpu_custom_call.1} parent=1 // pred_fallthru
      _
    // Predicated region
    $region22: #{tpu_custom_call.1} parent=1 // pred_check
      _
    $region23: #{tpu_custom_call.1} parent=1 // pred_check_branch
      %84 = sbr.rel (0) target = $region25
    $region24: #{tpu_custom_call.1} parent=1 // pred_region
      _
    $region25: #{tpu_custom_call.1} parent=1 // pred_fallthru
      _
    %85 = vsyncpa [#allocation3], 1
    %86 = vsyncpa [#allocation4], 1

</llo_original>
